<compile_context>
chip_gen: v7x
topology: tpu7x:2x2x1
jax: 0.10.0
libtpu: 0.0.40
codegen_flags: <defaults>
</compile_context>

<pallas_src>
import jax
import jax.numpy as jnp
from jax.experimental import pallas as pl
from jax.experimental.pallas import tpu as pltpu

HIDDEN = 10
LANES = 128
SUBLANES = 8
TILE_ROWS = 1024       # max rows of the lane-dense [rows,128] layout per grid step (512 KiB)
STRIP_ROWS = 64        # rows per in-kernel strip (8 vregs): x / affine / clamp stay in vregs
TARGET_GRID = 4        # aim for >= 4 grid steps so v7x's 2 TensorCores both get work
FAST_PATH_ELEMS = 16 * 1024


def _cdiv(a: int, b: int) -> int:
    return (a + b - 1) // b


def _round_up(a: int, b: int) -> int:
    return _cdiv(a, b) * b


def _make_kernel(tile: int, strip: int):
    n_strips = tile // strip

    def kernel(c1_ref, c2_ref, pos_ref, b2_ref, x_ref, o_ref):
        # x_ref / o_ref: [tile, 128] f32 VMEM blocks (lane-dense batch).
        # c1/c2: [10] f32, pos: [10] i32, b2: [1] f32 — all SMEM scalars.
        # Init the accumulator (= output block) with the output bias (single splat pass).
        o_ref[...] = jnp.full((tile, LANES), b2_ref[0], dtype=jnp.float32)

        # One pass per hidden unit.  w2 is folded into (c1, c2); the sign of w2 picks
        # max(.,0) vs min(.,0) via a scalar branch evaluated once per unit per tile.
        for j in range(HIDDEN):
            c1 = c1_ref[j]
            c2 = c2_ref[j]

            def _accumulate(clamp, c1=c1, c2=c2):
                # Static 64-row strips: per output vreg this is 2 vld + 1 vst + 4 VALU ops,
                # with all intermediates register resident.
                for s in range(n_strips):
                    r0 = s * strip
                    xs = x_ref[pl.ds(r0, strip), :]
                    o_ref[pl.ds(r0, strip), :] += clamp(xs * c1 + c2, 0.0)

            @pl.when(pos_ref[j] != 0)        # w2[j] >= 0 :  w2*relu(a) == max(w2*a, 0)
            def _():
                _accumulate(jnp.maximum)

            @pl.when(pos_ref[j] == 0)        # w2[j] <  0 :  w2*relu(a) == min(w2*a, 0)
            def _():
                _accumulate(jnp.minimum)

    return kernel


def simple_linear_regression(x, w1, b1, w2, b2, *, force_kernel=False):
    """x: [B,1] f32; w1:[1,10] b1:[1,10] w2:[10,1] b2:[1,1] -> [B,1] f32.
    Computes relu(x @ w1 + b1) @ w2 + b2."""
    B = x.shape[0]
    w1_s = w1.reshape(HIDDEN).astype(jnp.float32)
    b1_s = b1.reshape(HIDDEN).astype(jnp.float32)
    w2_s = w2.reshape(HIDDEN).astype(jnp.float32)
    b2_s = b2.reshape(1).astype(jnp.float32)

    # ---- small-batch fast path: plain fused XLA is strictly cheaper below ~16K elements ----
    if B <= FAST_PATH_ELEMS and not force_kernel:
        xf = x.reshape(B, 1).astype(jnp.float32)
        h = jnp.maximum(xf * w1_s[None, :] + b1_s[None, :], 0.0)
        return h @ w2_s[:, None] + b2_s[None, :]

    # ---- lane-dense batch layout: [B,1] -> padded [rows, 128] ----
    rows8 = _round_up(_cdiv(B, LANES), SUBLANES)
    # Tile: as large as possible (pipelining, low per-step overhead) but small enough that the
    # grid has >= TARGET_GRID steps (v7x megacore); multiple of STRIP_ROWS once big enough.
    tile = min(TILE_ROWS, _round_up(_cdiv(rows8, TARGET_GRID), SUBLANES))
    if tile >= STRIP_ROWS:
        tile = (tile // STRIP_ROWS) * STRIP_ROWS
    strip = min(STRIP_ROWS, tile)
    rows = _round_up(rows8, tile)
    padded_b = rows * LANES

    x_flat = jnp.pad(x.reshape(-1).astype(jnp.float32), (0, padded_b - B))
    x2d = x_flat.reshape(rows, LANES)

    # Fold w2 into layer 1: w2*relu(w1*x + b1) == {max|min}(c1*x + c2, 0) by sign(w2).
    c1_s = w1_s * w2_s
    c2_s = b1_s * w2_s
    pos_s = (w2_s >= 0.0).astype(jnp.int32)

    smem = pl.BlockSpec(memory_space=pltpu.MemorySpace.SMEM)
    out2d = pl.pallas_call(
        _make_kernel(tile, strip),
        out_shape=jax.ShapeDtypeStruct((rows, LANES), jnp.float32),
        grid_spec=pl.GridSpec(
            grid=(rows // tile,),
            in_specs=[
                smem, smem, smem, smem,                          # c1, c2, pos, b2 (resident)
                pl.BlockSpec((tile, LANES), lambda i: (i, 0)),   # x tile
            ],
            out_specs=pl.BlockSpec((tile, LANES), lambda i: (i, 0)),
        ),
        input_output_aliases={4: 0},        # reuse the padded-x HBM buffer for the output
        compiler_params=pltpu.CompilerParams(
            dimension_semantics=("parallel",),                   # shards across v7x's 2 TCs
        ),
    )(c1_s, c2_s, pos_s, b2_s, x2d)

    return out2d.reshape(-1)[:B].reshape(B, 1)


def init_params(key):
    """Deterministic init mirroring nn.Linear shapes (uniform +/- 1/sqrt(fan_in)),
    stored transposed vs PyTorch ([in, out]) so y = relu(x @ W1 + b1) @ W2 + b2."""
    k1, k2, k3, k4 = jax.random.split(key, 4)
    bound1 = 1.0                       # 1/sqrt(1)
    w1 = jax.random.uniform(k1, (1, 10), jnp.float32, -bound1, bound1)
    b1 = jax.random.uniform(k2, (1, 10), jnp.float32, -bound1, bound1)
    bound2 = 1.0 / jnp.sqrt(10.0)
    w2 = jax.random.uniform(k3, (10, 1), jnp.float32, -bound2, bound2)
    b2 = jax.random.uniform(k4, (1, 1), jnp.float32, -bound2, bound2)
    return w1, b1, w2, b2


if __name__ == "__main__":
    key = jax.random.PRNGKey(0)
    kx, kp = jax.random.split(key)
    w1, b1, w2, b2 = init_params(kp)

    def ref(x):
        return jnp.maximum(x @ w1 + b1, 0.0) @ w2 + b2

    # Fast path (small B), forced-kernel path (tiny tile + padding, grid=(1,)), and natural
    # kernel path (multi-step grid, multi-strip tiles, non-multiple-of-128 batch).
    cases = [(8, False), (300, False), (8, True), (300, True), (40_000, False), (100_000, False)]
    for B, force in cases:
        x = jax.random.normal(jax.random.fold_in(kx, B), (B, 1), jnp.float32)
        out = jax.block_until_ready(
            simple_linear_regression(x, w1, b1, w2, b2, force_kernel=force))
        assert out.shape == (B, 1), (out.shape, B)
        assert jnp.allclose(out, ref(x), atol=1e-5, rtol=1e-5), f"mismatch at B={B}, force={force}"

    print("KERNEL_OK")
</pallas_src>

<mosaic_0001>
module attributes {stable_mosaic.version = 11 : i64} {
  func.func @kernel(%arg0: i32, %arg1: memref<10xf32, #tpu.memory_space<smem>>, %arg2: memref<10xf32, #tpu.memory_space<smem>>, %arg3: memref<10xi32, #tpu.memory_space<smem>>, %arg4: memref<1xf32, #tpu.memory_space<smem>>, %arg5: memref<8x128xf32, #tpu.memory_space<vmem>>, %arg6: memref<8x128xf32, #tpu.memory_space<vmem>>) attributes {dimension_semantics = [#tpu.dimension_semantics<parallel>], iteration_bounds = array<i64: 1>, scalar_prefetch = 0 : i64, scratch_operands = 0 : i64, tpu.core_type = #tpu.core_type<tc>, window_params = [{transform_indices = @transform_0, window_bounds = array<i64: 10>}, {transform_indices = @transform_1, window_bounds = array<i64: 10>}, {transform_indices = @transform_2, window_bounds = array<i64: 10>}, {transform_indices = @transform_3, window_bounds = array<i64: 1>}, {transform_indices = @transform_4, window_bounds = array<i64: 8, 128>}, {transform_indices = @transform_5, window_bounds = array<i64: 8, 128>}]} {
    %c0 = arith.constant 0 : index
    %0 = memref.load %arg4[%c0] : memref<1xf32, #tpu.memory_space<smem>>
    %1 = vector.broadcast %0 : f32 to vector<8x128xf32>
    %c0_0 = arith.constant 0 : index
    %c0_1 = arith.constant 0 : index
    %2 = vector.load %arg6[%c0_0, %c0_1] : memref<8x128xf32, #tpu.memory_space<vmem>>, vector<8x128xf32>
    tpu.vector_store %arg6[%c0_0, %c0_1], %1 {strides = array<i32>} : memref<8x128xf32, #tpu.memory_space<vmem>>, vector<8x128xf32>,
    %c0_2 = arith.constant 0 : index
    %3 = memref.load %arg1[%c0_2] : memref<10xf32, #tpu.memory_space<smem>>
    %c0_3 = arith.constant 0 : index
    %4 = memref.load %arg2[%c0_3] : memref<10xf32, #tpu.memory_space<smem>>
    %c0_4 = arith.constant 0 : index
    %5 = memref.load %arg3[%c0_4] : memref<10xi32, #tpu.memory_space<smem>>
    %c0_i32 = arith.constant 0 : i32
    %6 = arith.cmpi ne, %5, %c0_i32 : i32
    %7 = arith.extui %6 : i1 to i32
    %c0_i32_5 = arith.constant 0 : i32
    %8 = arith.cmpi ne, %7, %c0_i32_5 : i32
    scf.if %8 {
      %c0_72 = arith.constant 0 : index
      %c0_73 = arith.constant 0 : index
      %103 = vector.load %arg5[%c0_72, %c0_73] : memref<8x128xf32, #tpu.memory_space<vmem>>, vector<8x128xf32>
      %c0_74 = arith.constant 0 : index
      %c0_75 = arith.constant 0 : index
      %104 = vector.load %arg6[%c0_74, %c0_75] : memref<8x128xf32, #tpu.memory_space<vmem>>, vector<8x128xf32>
      %105 = vector.broadcast %3 : f32 to vector<8x128xf32>
      %106 = arith.mulf %103, %105 : vector<8x128xf32>
      %107 = vector.broadcast %4 : f32 to vector<8x128xf32>
      %108 = arith.addf %106, %107 : vector<8x128xf32>
      %cst = arith.constant 0.000000e+00 : f32
      %109 = vector.broadcast %cst : f32 to vector<8x128xf32>
      %110 = arith.maximumf %108, %109 : vector<8x128xf32>
      %111 = arith.addf %104, %110 : vector<8x128xf32>
      %c0_76 = arith.constant 0 : index
      %c0_77 = arith.constant 0 : index
      %112 = vector.load %arg6[%c0_76, %c0_77] : memref<8x128xf32, #tpu.memory_space<vmem>>, vector<8x128xf32>
      tpu.vector_store %arg6[%c0_76, %c0_77], %111 {strides = array<i32>} : memref<8x128xf32, #tpu.memory_space<vmem>>, vector<8x128xf32>,
    } else {
    }
    %c0_6 = arith.constant 0 : index
    %9 = memref.load %arg3[%c0_6] : memref<10xi32, #tpu.memory_space<smem>>
    %c0_i32_7 = arith.constant 0 : i32
    %10 = arith.cmpi eq, %9, %c0_i32_7 : i32
    %11 = arith.extui %10 : i1 to i32
    %c0_i32_8 = arith.constant 0 : i32
    %12 = arith.cmpi ne, %11, %c0_i32_8 : i32
    scf.if %12 {
      %c0_72 = arith.constant 0 : index
      %c0_73 = arith.constant 0 : index
      %103 = vector.load %arg5[%c0_72, %c0_73] : memref<8x128xf32, #tpu.memory_space<vmem>>, vector<8x128xf32>
      %c0_74 = arith.constant 0 : index
      %c0_75 = arith.constant 0 : index
      %104 = vector.load %arg6[%c0_74, %c0_75] : memref<8x128xf32, #tpu.memory_space<vmem>>, vector<8x128xf32>
      %105 = vector.broadcast %3 : f32 to vector<8x128xf32>
      %106 = arith.mulf %103, %105 : vector<8x128xf32>
      %107 = vector.broadcast %4 : f32 to vector<8x128xf32>
      %108 = arith.addf %106, %107 : vector<8x128xf32>
      %cst = arith.constant 0.000000e+00 : f32
      %109 = vector.broadcast %cst : f32 to vector<8x128xf32>
      %110 = arith.minimumf %108, %109 : vector<8x128xf32>
      %111 = arith.addf %104, %110 : vector<8x128xf32>
      %c0_76 = arith.constant 0 : index
      %c0_77 = arith.constant 0 : index
      %112 = vector.load %arg6[%c0_76, %c0_77] : memref<8x128xf32, #tpu.memory_space<vmem>>, vector<8x128xf32>
      tpu.vector_store %arg6[%c0_76, %c0_77], %111 {strides = array<i32>} : memref<8x128xf32, #tpu.memory_space<vmem>>, vector<8x128xf32>,
    } else {
    }
    %c1 = arith.constant 1 : index
    %13 = memref.load %arg1[%c1] : memref<10xf32, #tpu.memory_space<smem>>
    %c1_9 = arith.constant 1 : index
    %14 = memref.load %arg2[%c1_9] : memref<10xf32, #tpu.memory_space<smem>>
    %c1_10 = arith.constant 1 : index
    %15 = memref.load %arg3[%c1_10] : memref<10xi32, #tpu.memory_space<smem>>
    %c0_i32_11 = arith.constant 0 : i32
    %16 = arith.cmpi ne, %15, %c0_i32_11 : i32
    %17 = arith.extui %16 : i1 to i32
    %c0_i32_12 = arith.constant 0 : i32
    %18 = arith.cmpi ne, %17, %c0_i32_12 : i32
    scf.if %18 {
      %c0_72 = arith.constant 0 : index
      %c0_73 = arith.constant 0 : index
      %103 = vector.load %arg5[%c0_72, %c0_73] : memref<8x128xf32, #tpu.memory_space<vmem>>, vector<8x128xf32>
      %c0_74 = arith.constant 0 : index
      %c0_75 = arith.constant 0 : index
      %104 = vector.load %arg6[%c0_74, %c0_75] : memref<8x128xf32, #tpu.memory_space<vmem>>, vector<8x128xf32>
      %105 = vector.broadcast %13 : f32 to vector<8x128xf32>
      %106 = arith.mulf %103, %105 : vector<8x128xf32>
      %107 = vector.broadcast %14 : f32 to vector<8x128xf32>
      %108 = arith.addf %106, %107 : vector<8x128xf32>
      %cst = arith.constant 0.000000e+00 : f32
      %109 = vector.broadcast %cst : f32 to vector<8x128xf32>
      %110 = arith.maximumf %108, %109 : vector<8x128xf32>
      %111 = arith.addf %104, %110 : vector<8x128xf32>
      %c0_76 = arith.constant 0 : index
      %c0_77 = arith.constant 0 : index
      %112 = vector.load %arg6[%c0_76, %c0_77] : memref<8x128xf32, #tpu.memory_space<vmem>>, vector<8x128xf32>
      tpu.vector_store %arg6[%c0_76, %c0_77], %111 {strides = array<i32>} : memref<8x128xf32, #tpu.memory_space<vmem>>, vector<8x128xf32>,
    } else {
    }
    %c1_13 = arith.constant 1 : index
    %19 = memref.load %arg3[%c1_13] : memref<10xi32, #tpu.memory_space<smem>>
    %c0_i32_14 = arith.constant 0 : i32
    %20 = arith.cmpi eq, %19, %c0_i32_14 : i32
    %21 = arith.extui %20 : i1 to i32
    %c0_i32_15 = arith.constant 0 : i32
    %22 = arith.cmpi ne, %21, %c0_i32_15 : i32
    scf.if %22 {
      %c0_72 = arith.constant 0 : index
      %c0_73 = arith.constant 0 : index
      %103 = vector.load %arg5[%c0_72, %c0_73] : memref<8x128xf32, #tpu.memory_space<vmem>>, vector<8x128xf32>
      %c0_74 = arith.constant 0 : index
      %c0_75 = arith.constant 0 : index
      %104 = vector.load %arg6[%c0_74, %c0_75] : memref<8x128xf32, #tpu.memory_space<vmem>>, vector<8x128xf32>
      %105 = vector.broadcast %13 : f32 to vector<8x128xf32>
      %106 = arith.mulf %103, %105 : vector<8x128xf32>
      %107 = vector.broadcast %14 : f32 to vector<8x128xf32>
      %108 = arith.addf %106, %107 : vector<8x128xf32>
      %cst = arith.constant 0.000000e+00 : f32
      %109 = vector.broadcast %cst : f32 to vector<8x128xf32>
      %110 = arith.minimumf %108, %109 : vector<8x128xf32>
      %111 = arith.addf %104, %110 : vector<8x128xf32>
      %c0_76 = arith.constant 0 : index
      %c0_77 = arith.constant 0 : index
      %112 = vector.load %arg6[%c0_76, %c0_77] : memref<8x128xf32, #tpu.memory_space<vmem>>, vector<8x128xf32>
      tpu.vector_store %arg6[%c0_76, %c0_77], %111 {strides = array<i32>} : memref<8x128xf32, #tpu.memory_space<vmem>>, vector<8x128xf32>,
    } else {
    }
    %c2 = arith.constant 2 : index
    %23 = memref.load %arg1[%c2] : memref<10xf32, #tpu.memory_space<smem>>
    %c2_16 = arith.constant 2 : index
    %24 = memref.load %arg2[%c2_16] : memref<10xf32, #tpu.memory_space<smem>>
    %c2_17 = arith.constant 2 : index
    %25 = memref.load %arg3[%c2_17] : memref<10xi32, #tpu.memory_space<smem>>
    %c0_i32_18 = arith.constant 0 : i32
    %26 = arith.cmpi ne, %25, %c0_i32_18 : i32
    %27 = arith.extui %26 : i1 to i32
    %c0_i32_19 = arith.constant 0 : i32
    %28 = arith.cmpi ne, %27, %c0_i32_19 : i32
    scf.if %28 {
      %c0_72 = arith.constant 0 : index
      %c0_73 = arith.constant 0 : index
      %103 = vector.load %arg5[%c0_72, %c0_73] : memref<8x128xf32, #tpu.memory_space<vmem>>, vector<8x128xf32>
      %c0_74 = arith.constant 0 : index
      %c0_75 = arith.constant 0 : index
      %104 = vector.load %arg6[%c0_74, %c0_75] : memref<8x128xf32, #tpu.memory_space<vmem>>, vector<8x128xf32>
      %105 = vector.broadcast %23 : f32 to vector<8x128xf32>
      %106 = arith.mulf %103, %105 : vector<8x128xf32>
      %107 = vector.broadcast %24 : f32 to vector<8x128xf32>
      %108 = arith.addf %106, %107 : vector<8x128xf32>
      %cst = arith.constant 0.000000e+00 : f32
      %109 = vector.broadcast %cst : f32 to vector<8x128xf32>
      %110 = arith.maximumf %108, %109 : vector<8x128xf32>
      %111 = arith.addf %104, %110 : vector<8x128xf32>
      %c0_76 = arith.constant 0 : index
      %c0_77 = arith.constant 0 : index
      %112 = vector.load %arg6[%c0_76, %c0_77] : memref<8x128xf32, #tpu.memory_space<vmem>>, vector<8x128xf32>
      tpu.vector_store %arg6[%c0_76, %c0_77], %111 {strides = array<i32>} : memref<8x128xf32, #tpu.memory_space<vmem>>, vector<8x128xf32>,
    } else {
    }
    %c2_20 = arith.constant 2 : index
    %29 = memref.load %arg3[%c2_20] : memref<10xi32, #tpu.memory_space<smem>>
    %c0_i32_21 = arith.constant 0 : i32
    %30 = arith.cmpi eq, %29, %c0_i32_21 : i32
    %31 = arith.extui %30 : i1 to i32
    %c0_i32_22 = arith.constant 0 : i32
    %32 = arith.cmpi ne, %31, %c0_i32_22 : i32
    scf.if %32 {
      %c0_72 = arith.constant 0 : index
      %c0_73 = arith.constant 0 : index
      %103 = vector.load %arg5[%c0_72, %c0_73] : memref<8x128xf32, #tpu.memory_space<vmem>>, vector<8x128xf32>
      %c0_74 = arith.constant 0 : index
      %c0_75 = arith.constant 0 : index
      %104 = vector.load %arg6[%c0_74, %c0_75] : memref<8x128xf32, #tpu.memory_space<vmem>>, vector<8x128xf32>
      %105 = vector.broadcast %23 : f32 to vector<8x128xf32>
      %106 = arith.mulf %103, %105 : vector<8x128xf32>
      %107 = vector.broadcast %24 : f32 to vector<8x128xf32>
      %108 = arith.addf %106, %107 : vector<8x128xf32>
      %cst = arith.constant 0.000000e+00 : f32
      %109 = vector.broadcast %cst : f32 to vector<8x128xf32>
      %110 = arith.minimumf %108, %109 : vector<8x128xf32>
      %111 = arith.addf %104, %110 : vector<8x128xf32>
      %c0_76 = arith.constant 0 : index
      %c0_77 = arith.constant 0 : index
      %112 = vector.load %arg6[%c0_76, %c0_77] : memref<8x128xf32, #tpu.memory_space<vmem>>, vector<8x128xf32>
      tpu.vector_store %arg6[%c0_76, %c0_77], %111 {strides = array<i32>} : memref<8x128xf32, #tpu.memory_space<vmem>>, vector<8x128xf32>,
    } else {
    }
    %c3 = arith.constant 3 : index
    %33 = memref.load %arg1[%c3] : memref<10xf32, #tpu.memory_space<smem>>
    %c3_23 = arith.constant 3 : index
    %34 = memref.load %arg2[%c3_23] : memref<10xf32, #tpu.memory_space<smem>>
    %c3_24 = arith.constant 3 : index
    %35 = memref.load %arg3[%c3_24] : memref<10xi32, #tpu.memory_space<smem>>
    %c0_i32_25 = arith.constant 0 : i32
    %36 = arith.cmpi ne, %35, %c0_i32_25 : i32
    %37 = arith.extui %36 : i1 to i32
    %c0_i32_26 = arith.constant 0 : i32
    %38 = arith.cmpi ne, %37, %c0_i32_26 : i32
    scf.if %38 {
      %c0_72 = arith.constant 0 : index
      %c0_73 = arith.constant 0 : index
      %103 = vector.load %arg5[%c0_72, %c0_73] : memref<8x128xf32, #tpu.memory_space<vmem>>, vector<8x128xf32>
      %c0_74 = arith.constant 0 : index
      %c0_75 = arith.constant 0 : index
      %104 = vector.load %arg6[%c0_74, %c0_75] : memref<8x128xf32, #tpu.memory_space<vmem>>, vector<8x128xf32>
      %105 = vector.broadcast %33 : f32 to vector<8x128xf32>
      %106 = arith.mulf %103, %105 : vector<8x128xf32>
      %107 = vector.broadcast %34 : f32 to vector<8x128xf32>
      %108 = arith.addf %106, %107 : vector<8x128xf32>
      %cst = arith.constant 0.000000e+00 : f32
      %109 = vector.broadcast %cst : f32 to vector<8x128xf32>
      %110 = arith.maximumf %108, %109 : vector<8x128xf32>
      %111 = arith.addf %104, %110 : vector<8x128xf32>
      %c0_76 = arith.constant 0 : index
      %c0_77 = arith.constant 0 : index
      %112 = vector.load %arg6[%c0_76, %c0_77] : memref<8x128xf32, #tpu.memory_space<vmem>>, vector<8x128xf32>
      tpu.vector_store %arg6[%c0_76, %c0_77], %111 {strides = array<i32>} : memref<8x128xf32, #tpu.memory_space<vmem>>, vector<8x128xf32>,
    } else {
    }
    %c3_27 = arith.constant 3 : index
    %39 = memref.load %arg3[%c3_27] : memref<10xi32, #tpu.memory_space<smem>>
    %c0_i32_28 = arith.constant 0 : i32
    %40 = arith.cmpi eq, %39, %c0_i32_28 : i32
    %41 = arith.extui %40 : i1 to i32
    %c0_i32_29 = arith.constant 0 : i32
    %42 = arith.cmpi ne, %41, %c0_i32_29 : i32
    scf.if %42 {
      %c0_72 = arith.constant 0 : index
      %c0_73 = arith.constant 0 : index
      %103 = vector.load %arg5[%c0_72, %c0_73] : memref<8x128xf32, #tpu.memory_space<vmem>>, vector<8x128xf32>
      %c0_74 = arith.constant 0 : index
      %c0_75 = arith.constant 0 : index
      %104 = vector.load %arg6[%c0_74, %c0_75] : memref<8x128xf32, #tpu.memory_space<vmem>>, vector<8x128xf32>
      %105 = vector.broadcast %33 : f32 to vector<8x128xf32>
      %106 = arith.mulf %103, %105 : vector<8x128xf32>
      %107 = vector.broadcast %34 : f32 to vector<8x128xf32>
      %108 = arith.addf %106, %107 : vector<8x128xf32>
      %cst = arith.constant 0.000000e+00 : f32
      %109 = vector.broadcast %cst : f32 to vector<8x128xf32>
      %110 = arith.minimumf %108, %109 : vector<8x128xf32>
      %111 = arith.addf %104, %110 : vector<8x128xf32>
      %c0_76 = arith.constant 0 : index
      %c0_77 = arith.constant 0 : index
      %112 = vector.load %arg6[%c0_76, %c0_77] : memref<8x128xf32, #tpu.memory_space<vmem>>, vector<8x128xf32>
      tpu.vector_store %arg6[%c0_76, %c0_77], %111 {strides = array<i32>} : memref<8x128xf32, #tpu.memory_space<vmem>>, vector<8x128xf32>,
    } else {
    }
    %c4 = arith.constant 4 : index
    %43 = memref.load %arg1[%c4] : memref<10xf32, #tpu.memory_space<smem>>
    %c4_30 = arith.constant 4 : index
    %44 = memref.load %arg2[%c4_30] : memref<10xf32, #tpu.memory_space<smem>>
    %c4_31 = arith.constant 4 : index
    %45 = memref.load %arg3[%c4_31] : memref<10xi32, #tpu.memory_space<smem>>
    %c0_i32_32 = arith.constant 0 : i32
    %46 = arith.cmpi ne, %45, %c0_i32_32 : i32
    %47 = arith.extui %46 : i1 to i32
    %c0_i32_33 = arith.constant 0 : i32
    %48 = arith.cmpi ne, %47, %c0_i32_33 : i32
    scf.if %48 {
      %c0_72 = arith.constant 0 : index
      %c0_73 = arith.constant 0 : index
      %103 = vector.load %arg5[%c0_72, %c0_73] : memref<8x128xf32, #tpu.memory_space<vmem>>, vector<8x128xf32>
      %c0_74 = arith.constant 0 : index
      %c0_75 = arith.constant 0 : index
      %104 = vector.load %arg6[%c0_74, %c0_75] : memref<8x128xf32, #tpu.memory_space<vmem>>, vector<8x128xf32>
      %105 = vector.broadcast %43 : f32 to vector<8x128xf32>
      %106 = arith.mulf %103, %105 : vector<8x128xf32>
      %107 = vector.broadcast %44 : f32 to vector<8x128xf32>
      %108 = arith.addf %106, %107 : vector<8x128xf32>
      %cst = arith.constant 0.000000e+00 : f32
      %109 = vector.broadcast %cst : f32 to vector<8x128xf32>
      %110 = arith.maximumf %108, %109 : vector<8x128xf32>
      %111 = arith.addf %104, %110 : vector<8x128xf32>
      %c0_76 = arith.constant 0 : index
      %c0_77 = arith.constant 0 : index
      %112 = vector.load %arg6[%c0_76, %c0_77] : memref<8x128xf32, #tpu.memory_space<vmem>>, vector<8x128xf32>
      tpu.vector_store %arg6[%c0_76, %c0_77], %111 {strides = array<i32>} : memref<8x128xf32, #tpu.memory_space<vmem>>, vector<8x128xf32>,
    } else {
    }
    %c4_34 = arith.constant 4 : index
    %49 = memref.load %arg3[%c4_34] : memref<10xi32, #tpu.memory_space<smem>>
    %c0_i32_35 = arith.constant 0 : i32
    %50 = arith.cmpi eq, %49, %c0_i32_35 : i32
    %51 = arith.extui %50 : i1 to i32
    %c0_i32_36 = arith.constant 0 : i32
    %52 = arith.cmpi ne, %51, %c0_i32_36 : i32
    scf.if %52 {
      %c0_72 = arith.constant 0 : index
      %c0_73 = arith.constant 0 : index
      %103 = vector.load %arg5[%c0_72, %c0_73] : memref<8x128xf32, #tpu.memory_space<vmem>>, vector<8x128xf32>
      %c0_74 = arith.constant 0 : index
      %c0_75 = arith.constant 0 : index
      %104 = vector.load %arg6[%c0_74, %c0_75] : memref<8x128xf32, #tpu.memory_space<vmem>>, vector<8x128xf32>
      %105 = vector.broadcast %43 : f32 to vector<8x128xf32>
      %106 = arith.mulf %103, %105 : vector<8x128xf32>
      %107 = vector.broadcast %44 : f32 to vector<8x128xf32>
      %108 = arith.addf %106, %107 : vector<8x128xf32>
      %cst = arith.constant 0.000000e+00 : f32
      %109 = vector.broadcast %cst : f32 to vector<8x128xf32>
      %110 = arith.minimumf %108, %109 : vector<8x128xf32>
      %111 = arith.addf %104, %110 : vector<8x128xf32>
      %c0_76 = arith.constant 0 : index
      %c0_77 = arith.constant 0 : index
      %112 = vector.load %arg6[%c0_76, %c0_77] : memref<8x128xf32, #tpu.memory_space<vmem>>, vector<8x128xf32>
      tpu.vector_store %arg6[%c0_76, %c0_77], %111 {strides = array<i32>} : memref<8x128xf32, #tpu.memory_space<vmem>>, vector<8x128xf32>,
    } else {
    }
    %c5 = arith.constant 5 : index
    %53 = memref.load %arg1[%c5] : memref<10xf32, #tpu.memory_space<smem>>
    %c5_37 = arith.constant 5 : index
    %54 = memref.load %arg2[%c5_37] : memref<10xf32, #tpu.memory_space<smem>>
    %c5_38 = arith.constant 5 : index
    %55 = memref.load %arg3[%c5_38] : memref<10xi32, #tpu.memory_space<smem>>
    %c0_i32_39 = arith.constant 0 : i32
    %56 = arith.cmpi ne, %55, %c0_i32_39 : i32
    %57 = arith.extui %56 : i1 to i32
    %c0_i32_40 = arith.constant 0 : i32
    %58 = arith.cmpi ne, %57, %c0_i32_40 : i32
    scf.if %58 {
      %c0_72 = arith.constant 0 : index
      %c0_73 = arith.constant 0 : index
      %103 = vector.load %arg5[%c0_72, %c0_73] : memref<8x128xf32, #tpu.memory_space<vmem>>, vector<8x128xf32>
      %c0_74 = arith.constant 0 : index
      %c0_75 = arith.constant 0 : index
      %104 = vector.load %arg6[%c0_74, %c0_75] : memref<8x128xf32, #tpu.memory_space<vmem>>, vector<8x128xf32>
      %105 = vector.broadcast %53 : f32 to vector<8x128xf32>
      %106 = arith.mulf %103, %105 : vector<8x128xf32>
      %107 = vector.broadcast %54 : f32 to vector<8x128xf32>
      %108 = arith.addf %106, %107 : vector<8x128xf32>
      %cst = arith.constant 0.000000e+00 : f32
      %109 = vector.broadcast %cst : f32 to vector<8x128xf32>
      %110 = arith.maximumf %108, %109 : vector<8x128xf32>
      %111 = arith.addf %104, %110 : vector<8x128xf32>
      %c0_76 = arith.constant 0 : index
      %c0_77 = arith.constant 0 : index
      %112 = vector.load %arg6[%c0_76, %c0_77] : memref<8x128xf32, #tpu.memory_space<vmem>>, vector<8x128xf32>
      tpu.vector_store %arg6[%c0_76, %c0_77], %111 {strides = array<i32>} : memref<8x128xf32, #tpu.memory_space<vmem>>, vector<8x128xf32>,
    } else {
    }
    %c5_41 = arith.constant 5 : index
    %59 = memref.load %arg3[%c5_41] : memref<10xi32, #tpu.memory_space<smem>>
    %c0_i32_42 = arith.constant 0 : i32
    %60 = arith.cmpi eq, %59, %c0_i32_42 : i32
    %61 = arith.extui %60 : i1 to i32
    %c0_i32_43 = arith.constant 0 : i32
    %62 = arith.cmpi ne, %61, %c0_i32_43 : i32
    scf.if %62 {
      %c0_72 = arith.constant 0 : index
      %c0_73 = arith.constant 0 : index
      %103 = vector.load %arg5[%c0_72, %c0_73] : memref<8x128xf32, #tpu.memory_space<vmem>>, vector<8x128xf32>
      %c0_74 = arith.constant 0 : index
      %c0_75 = arith.constant 0 : index
      %104 = vector.load %arg6[%c0_74, %c0_75] : memref<8x128xf32, #tpu.memory_space<vmem>>, vector<8x128xf32>
      %105 = vector.broadcast %53 : f32 to vector<8x128xf32>
      %106 = arith.mulf %103, %105 : vector<8x128xf32>
      %107 = vector.broadcast %54 : f32 to vector<8x128xf32>
      %108 = arith.addf %106, %107 : vector<8x128xf32>
      %cst = arith.constant 0.000000e+00 : f32
      %109 = vector.broadcast %cst : f32 to vector<8x128xf32>
      %110 = arith.minimumf %108, %109 : vector<8x128xf32>
      %111 = arith.addf %104, %110 : vector<8x128xf32>
      %c0_76 = arith.constant 0 : index
      %c0_77 = arith.constant 0 : index
      %112 = vector.load %arg6[%c0_76, %c0_77] : memref<8x128xf32, #tpu.memory_space<vmem>>, vector<8x128xf32>
      tpu.vector_store %arg6[%c0_76, %c0_77], %111 {strides = array<i32>} : memref<8x128xf32, #tpu.memory_space<vmem>>, vector<8x128xf32>,
    } else {
    }
    %c6 = arith.constant 6 : index
    %63 = memref.load %arg1[%c6] : memref<10xf32, #tpu.memory_space<smem>>
    %c6_44 = arith.constant 6 : index
    %64 = memref.load %arg2[%c6_44] : memref<10xf32, #tpu.memory_space<smem>>
    %c6_45 = arith.constant 6 : index
    %65 = memref.load %arg3[%c6_45] : memref<10xi32, #tpu.memory_space<smem>>
    %c0_i32_46 = arith.constant 0 : i32
    %66 = arith.cmpi ne, %65, %c0_i32_46 : i32
    %67 = arith.extui %66 : i1 to i32
    %c0_i32_47 = arith.constant 0 : i32
    %68 = arith.cmpi ne, %67, %c0_i32_47 : i32
    scf.if %68 {
      %c0_72 = arith.constant 0 : index
      %c0_73 = arith.constant 0 : index
      %103 = vector.load %arg5[%c0_72, %c0_73] : memref<8x128xf32, #tpu.memory_space<vmem>>, vector<8x128xf32>
      %c0_74 = arith.constant 0 : index
      %c0_75 = arith.constant 0 : index
      %104 = vector.load %arg6[%c0_74, %c0_75] : memref<8x128xf32, #tpu.memory_space<vmem>>, vector<8x128xf32>
      %105 = vector.broadcast %63 : f32 to vector<8x128xf32>
      %106 = arith.mulf %103, %105 : vector<8x128xf32>
      %107 = vector.broadcast %64 : f32 to vector<8x128xf32>
      %108 = arith.addf %106, %107 : vector<8x128xf32>
      %cst = arith.constant 0.000000e+00 : f32
      %109 = vector.broadcast %cst : f32 to vector<8x128xf32>
      %110 = arith.maximumf %108, %109 : vector<8x128xf32>
      %111 = arith.addf %104, %110 : vector<8x128xf32>
      %c0_76 = arith.constant 0 : index
      %c0_77 = arith.constant 0 : index
      %112 = vector.load %arg6[%c0_76, %c0_77] : memref<8x128xf32, #tpu.memory_space<vmem>>, vector<8x128xf32>
      tpu.vector_store %arg6[%c0_76, %c0_77], %111 {strides = array<i32>} : memref<8x128xf32, #tpu.memory_space<vmem>>, vector<8x128xf32>,
    } else {
    }
    %c6_48 = arith.constant 6 : index
    %69 = memref.load %arg3[%c6_48] : memref<10xi32, #tpu.memory_space<smem>>
    %c0_i32_49 = arith.constant 0 : i32
    %70 = arith.cmpi eq, %69, %c0_i32_49 : i32
    %71 = arith.extui %70 : i1 to i32
    %c0_i32_50 = arith.constant 0 : i32
    %72 = arith.cmpi ne, %71, %c0_i32_50 : i32
    scf.if %72 {
      %c0_72 = arith.constant 0 : index
      %c0_73 = arith.constant 0 : index
      %103 = vector.load %arg5[%c0_72, %c0_73] : memref<8x128xf32, #tpu.memory_space<vmem>>, vector<8x128xf32>
      %c0_74 = arith.constant 0 : index
      %c0_75 = arith.constant 0 : index
      %104 = vector.load %arg6[%c0_74, %c0_75] : memref<8x128xf32, #tpu.memory_space<vmem>>, vector<8x128xf32>
      %105 = vector.broadcast %63 : f32 to vector<8x128xf32>
      %106 = arith.mulf %103, %105 : vector<8x128xf32>
      %107 = vector.broadcast %64 : f32 to vector<8x128xf32>
      %108 = arith.addf %106, %107 : vector<8x128xf32>
      %cst = arith.constant 0.000000e+00 : f32
      %109 = vector.broadcast %cst : f32 to vector<8x128xf32>
      %110 = arith.minimumf %108, %109 : vector<8x128xf32>
      %111 = arith.addf %104, %110 : vector<8x128xf32>
      %c0_76 = arith.constant 0 : index
      %c0_77 = arith.constant 0 : index
      %112 = vector.load %arg6[%c0_76, %c0_77] : memref<8x128xf32, #tpu.memory_space<vmem>>, vector<8x128xf32>
      tpu.vector_store %arg6[%c0_76, %c0_77], %111 {strides = array<i32>} : memref<8x128xf32, #tpu.memory_space<vmem>>, vector<8x128xf32>,
    } else {
    }
    %c7 = arith.constant 7 : index
    %73 = memref.load %arg1[%c7] : memref<10xf32, #tpu.memory_space<smem>>
    %c7_51 = arith.constant 7 : index
    %74 = memref.load %arg2[%c7_51] : memref<10xf32, #tpu.memory_space<smem>>
    %c7_52 = arith.constant 7 : index
    %75 = memref.load %arg3[%c7_52] : memref<10xi32, #tpu.memory_space<smem>>
    %c0_i32_53 = arith.constant 0 : i32
    %76 = arith.cmpi ne, %75, %c0_i32_53 : i32
    %77 = arith.extui %76 : i1 to i32
    %c0_i32_54 = arith.constant 0 : i32
    %78 = arith.cmpi ne, %77, %c0_i32_54 : i32
    scf.if %78 {
      %c0_72 = arith.constant 0 : index
      %c0_73 = arith.constant 0 : index
      %103 = vector.load %arg5[%c0_72, %c0_73] : memref<8x128xf32, #tpu.memory_space<vmem>>, vector<8x128xf32>
      %c0_74 = arith.constant 0 : index
      %c0_75 = arith.constant 0 : index
      %104 = vector.load %arg6[%c0_74, %c0_75] : memref<8x128xf32, #tpu.memory_space<vmem>>, vector<8x128xf32>
      %105 = vector.broadcast %73 : f32 to vector<8x128xf32>
      %106 = arith.mulf %103, %105 : vector<8x128xf32>
      %107 = vector.broadcast %74 : f32 to vector<8x128xf32>
      %108 = arith.addf %106, %107 : vector<8x128xf32>
      %cst = arith.constant 0.000000e+00 : f32
      %109 = vector.broadcast %cst : f32 to vector<8x128xf32>
      %110 = arith.maximumf %108, %109 : vector<8x128xf32>
      %111 = arith.addf %104, %110 : vector<8x128xf32>
      %c0_76 = arith.constant 0 : index
      %c0_77 = arith.constant 0 : index
      %112 = vector.load %arg6[%c0_76, %c0_77] : memref<8x128xf32, #tpu.memory_space<vmem>>, vector<8x128xf32>
      tpu.vector_store %arg6[%c0_76, %c0_77], %111 {strides = array<i32>} : memref<8x128xf32, #tpu.memory_space<vmem>>, vector<8x128xf32>,
    } else {
    }
    %c7_55 = arith.constant 7 : index
    %79 = memref.load %arg3[%c7_55] : memref<10xi32, #tpu.memory_space<smem>>
    %c0_i32_56 = arith.constant 0 : i32
    %80 = arith.cmpi eq, %79, %c0_i32_56 : i32
    %81 = arith.extui %80 : i1 to i32
    %c0_i32_57 = arith.constant 0 : i32
    %82 = arith.cmpi ne, %81, %c0_i32_57 : i32
    scf.if %82 {
      %c0_72 = arith.constant 0 : index
      %c0_73 = arith.constant 0 : index
      %103 = vector.load %arg5[%c0_72, %c0_73] : memref<8x128xf32, #tpu.memory_space<vmem>>, vector<8x128xf32>
      %c0_74 = arith.constant 0 : index
      %c0_75 = arith.constant 0 : index
      %104 = vector.load %arg6[%c0_74, %c0_75] : memref<8x128xf32, #tpu.memory_space<vmem>>, vector<8x128xf32>
      %105 = vector.broadcast %73 : f32 to vector<8x128xf32>
      %106 = arith.mulf %103, %105 : vector<8x128xf32>
      %107 = vector.broadcast %74 : f32 to vector<8x128xf32>
      %108 = arith.addf %106, %107 : vector<8x128xf32>
      %cst = arith.constant 0.000000e+00 : f32
      %109 = vector.broadcast %cst : f32 to vector<8x128xf32>
      %110 = arith.minimumf %108, %109 : vector<8x128xf32>
      %111 = arith.addf %104, %110 : vector<8x128xf32>
      %c0_76 = arith.constant 0 : index
      %c0_77 = arith.constant 0 : index
      %112 = vector.load %arg6[%c0_76, %c0_77] : memref<8x128xf32, #tpu.memory_space<vmem>>, vector<8x128xf32>
      tpu.vector_store %arg6[%c0_76, %c0_77], %111 {strides = array<i32>} : memref<8x128xf32, #tpu.memory_space<vmem>>, vector<8x128xf32>,
    } else {
    }
    %c8 = arith.constant 8 : index
    %83 = memref.load %arg1[%c8] : memref<10xf32, #tpu.memory_space<smem>>
    %c8_58 = arith.constant 8 : index
    %84 = memref.load %arg2[%c8_58] : memref<10xf32, #tpu.memory_space<smem>>
    %c8_59 = arith.constant 8 : index
    %85 = memref.load %arg3[%c8_59] : memref<10xi32, #tpu.memory_space<smem>>
    %c0_i32_60 = arith.constant 0 : i32
    %86 = arith.cmpi ne, %85, %c0_i32_60 : i32
    %87 = arith.extui %86 : i1 to i32
    %c0_i32_61 = arith.constant 0 : i32
    %88 = arith.cmpi ne, %87, %c0_i32_61 : i32
    scf.if %88 {
      %c0_72 = arith.constant 0 : index
      %c0_73 = arith.constant 0 : index
      %103 = vector.load %arg5[%c0_72, %c0_73] : memref<8x128xf32, #tpu.memory_space<vmem>>, vector<8x128xf32>
      %c0_74 = arith.constant 0 : index
      %c0_75 = arith.constant 0 : index
      %104 = vector.load %arg6[%c0_74, %c0_75] : memref<8x128xf32, #tpu.memory_space<vmem>>, vector<8x128xf32>
      %105 = vector.broadcast %83 : f32 to vector<8x128xf32>
      %106 = arith.mulf %103, %105 : vector<8x128xf32>
      %107 = vector.broadcast %84 : f32 to vector<8x128xf32>
      %108 = arith.addf %106, %107 : vector<8x128xf32>
      %cst = arith.constant 0.000000e+00 : f32
      %109 = vector.broadcast %cst : f32 to vector<8x128xf32>
      %110 = arith.maximumf %108, %109 : vector<8x128xf32>
      %111 = arith.addf %104, %110 : vector<8x128xf32>
      %c0_76 = arith.constant 0 : index
      %c0_77 = arith.constant 0 : index
      %112 = vector.load %arg6[%c0_76, %c0_77] : memref<8x128xf32, #tpu.memory_space<vmem>>, vector<8x128xf32>
      tpu.vector_store %arg6[%c0_76, %c0_77], %111 {strides = array<i32>} : memref<8x128xf32, #tpu.memory_space<vmem>>, vector<8x128xf32>,
    } else {
    }
    %c8_62 = arith.constant 8 : index
    %89 = memref.load %arg3[%c8_62] : memref<10xi32, #tpu.memory_space<smem>>
    %c0_i32_63 = arith.constant 0 : i32
    %90 = arith.cmpi eq, %89, %c0_i32_63 : i32
    %91 = arith.extui %90 : i1 to i32
    %c0_i32_64 = arith.constant 0 : i32
    %92 = arith.cmpi ne, %91, %c0_i32_64 : i32
    scf.if %92 {
      %c0_72 = arith.constant 0 : index
      %c0_73 = arith.constant 0 : index
      %103 = vector.load %arg5[%c0_72, %c0_73] : memref<8x128xf32, #tpu.memory_space<vmem>>, vector<8x128xf32>
      %c0_74 = arith.constant 0 : index
      %c0_75 = arith.constant 0 : index
      %104 = vector.load %arg6[%c0_74, %c0_75] : memref<8x128xf32, #tpu.memory_space<vmem>>, vector<8x128xf32>
      %105 = vector.broadcast %83 : f32 to vector<8x128xf32>
      %106 = arith.mulf %103, %105 : vector<8x128xf32>
      %107 = vector.broadcast %84 : f32 to vector<8x128xf32>
      %108 = arith.addf %106, %107 : vector<8x128xf32>
      %cst = arith.constant 0.000000e+00 : f32
      %109 = vector.broadcast %cst : f32 to vector<8x128xf32>
      %110 = arith.minimumf %108, %109 : vector<8x128xf32>
      %111 = arith.addf %104, %110 : vector<8x128xf32>
      %c0_76 = arith.constant 0 : index
      %c0_77 = arith.constant 0 : index
      %112 = vector.load %arg6[%c0_76, %c0_77] : memref<8x128xf32, #tpu.memory_space<vmem>>, vector<8x128xf32>
      tpu.vector_store %arg6[%c0_76, %c0_77], %111 {strides = array<i32>} : memref<8x128xf32, #tpu.memory_space<vmem>>, vector<8x128xf32>,
    } else {
    }
    %c9 = arith.constant 9 : index
    %93 = memref.load %arg1[%c9] : memref<10xf32, #tpu.memory_space<smem>>
    %c9_65 = arith.constant 9 : index
    %94 = memref.load %arg2[%c9_65] : memref<10xf32, #tpu.memory_space<smem>>
    %c9_66 = arith.constant 9 : index
    %95 = memref.load %arg3[%c9_66] : memref<10xi32, #tpu.memory_space<smem>>
    %c0_i32_67 = arith.constant 0 : i32
    %96 = arith.cmpi ne, %95, %c0_i32_67 : i32
    %97 = arith.extui %96 : i1 to i32
    %c0_i32_68 = arith.constant 0 : i32
    %98 = arith.cmpi ne, %97, %c0_i32_68 : i32
    scf.if %98 {
      %c0_72 = arith.constant 0 : index
      %c0_73 = arith.constant 0 : index
      %103 = vector.load %arg5[%c0_72, %c0_73] : memref<8x128xf32, #tpu.memory_space<vmem>>, vector<8x128xf32>
      %c0_74 = arith.constant 0 : index
      %c0_75 = arith.constant 0 : index
      %104 = vector.load %arg6[%c0_74, %c0_75] : memref<8x128xf32, #tpu.memory_space<vmem>>, vector<8x128xf32>
      %105 = vector.broadcast %93 : f32 to vector<8x128xf32>
      %106 = arith.mulf %103, %105 : vector<8x128xf32>
      %107 = vector.broadcast %94 : f32 to vector<8x128xf32>
      %108 = arith.addf %106, %107 : vector<8x128xf32>
      %cst = arith.constant 0.000000e+00 : f32
      %109 = vector.broadcast %cst : f32 to vector<8x128xf32>
      %110 = arith.maximumf %108, %109 : vector<8x128xf32>
      %111 = arith.addf %104, %110 : vector<8x128xf32>
      %c0_76 = arith.constant 0 : index
      %c0_77 = arith.constant 0 : index
      %112 = vector.load %arg6[%c0_76, %c0_77] : memref<8x128xf32, #tpu.memory_space<vmem>>, vector<8x128xf32>
      tpu.vector_store %arg6[%c0_76, %c0_77], %111 {strides = array<i32>} : memref<8x128xf32, #tpu.memory_space<vmem>>, vector<8x128xf32>,
    } else {
    }
    %c9_69 = arith.constant 9 : index
    %99 = memref.load %arg3[%c9_69] : memref<10xi32, #tpu.memory_space<smem>>
    %c0_i32_70 = arith.constant 0 : i32
    %100 = arith.cmpi eq, %99, %c0_i32_70 : i32
    %101 = arith.extui %100 : i1 to i32
    %c0_i32_71 = arith.constant 0 : i32
    %102 = arith.cmpi ne, %101, %c0_i32_71 : i32
    scf.if %102 {
      %c0_72 = arith.constant 0 : index
      %c0_73 = arith.constant 0 : index
      %103 = vector.load %arg5[%c0_72, %c0_73] : memref<8x128xf32, #tpu.memory_space<vmem>>, vector<8x128xf32>
      %c0_74 = arith.constant 0 : index
      %c0_75 = arith.constant 0 : index
      %104 = vector.load %arg6[%c0_74, %c0_75] : memref<8x128xf32, #tpu.memory_space<vmem>>, vector<8x128xf32>
      %105 = vector.broadcast %93 : f32 to vector<8x128xf32>
      %106 = arith.mulf %103, %105 : vector<8x128xf32>
      %107 = vector.broadcast %94 : f32 to vector<8x128xf32>
      %108 = arith.addf %106, %107 : vector<8x128xf32>
      %cst = arith.constant 0.000000e+00 : f32
      %109 = vector.broadcast %cst : f32 to vector<8x128xf32>
      %110 = arith.minimumf %108, %109 : vector<8x128xf32>
      %111 = arith.addf %104, %110 : vector<8x128xf32>
      %c0_76 = arith.constant 0 : index
      %c0_77 = arith.constant 0 : index
      %112 = vector.load %arg6[%c0_76, %c0_77] : memref<8x128xf32, #tpu.memory_space<vmem>>, vector<8x128xf32>
      tpu.vector_store %arg6[%c0_76, %c0_77], %111 {strides = array<i32>} : memref<8x128xf32, #tpu.memory_space<vmem>>, vector<8x128xf32>,
    } else {
    }
    return
  }
  func.func @transform_0(%arg0: i32) -> i32 {
    %c0_i32 = arith.constant 0 : i32
    %c0_i32_0 = arith.constant 0 : i32
    return %c0_i32 : i32
  }
  func.func @transform_1(%arg0: i32) -> i32 {
    %c0_i32 = arith.constant 0 : i32
    %c0_i32_0 = arith.constant 0 : i32
    return %c0_i32 : i32
  }
  func.func @transform_2(%arg0: i32) -> i32 {
    %c0_i32 = arith.constant 0 : i32
    %c0_i32_0 = arith.constant 0 : i32
    return %c0_i32 : i32
  }
  func.func @transform_3(%arg0: i32) -> i32 {
    %c0_i32 = arith.constant 0 : i32
    %c0_i32_0 = arith.constant 0 : i32
    return %c0_i32 : i32
  }
  func.func @transform_4(%arg0: i32) -> (i32, i32) {
    %c0_i32 = arith.constant 0 : i32
    %c0_i32_0 = arith.constant 0 : i32
    return %arg0, %c0_i32 : i32, i32
  }
  func.func @transform_5(%arg0: i32) -> (i32, i32) {
    %c0_i32 = arith.constant 0 : i32
    %c0_i32_0 = arith.constant 0 : i32
    return %arg0, %c0_i32 : i32, i32
  }
}

</mosaic_0001>

<llo_original>
// kernel: tpu_custom_call.1
$region0: #{tpu_custom_call.1}
  #allocation0 [shape = 'u32[]', space=smem, size = 0x4, offset = 0x4, fixed_abs, tag = 'smem constant byte address 0x4 - core index']
  #allocation1 [shape = 'u32[144,128]{1,0:T(1,128)}', space=vmem, size = 0x12000, scoped, tag = 'internal scratch']
  #allocation2 [shape = 'f32[1]{0:T(128)S(6)}', space=smem, size = 0x200, scoped, tag = 'scoped memory for tpu_custom_call.1']
  %s0 = inlined_call_operand.vmem [shape: f32[10], index: 0, kind: input, shape index: {}]
  %s1 = inlined_call_operand.vmem [shape: f32[10], index: 1, kind: input, shape index: {}]
  %s2 = inlined_call_operand.vmem [shape: s32[10], index: 2, kind: input, shape index: {}]
  %s3 = inlined_call_operand.<no memory space> [shape: f32[1], index: 3, kind: input, shape index: {}]
  %s4 = inlined_call_operand.hbm [shape: f32[8,128], index: 4, kind: input, shape index: {}, may-alias: {4,5}]
  %s5 = inlined_call_operand.hbm [shape: f32[8,128], index: 5, kind: output, shape index: {}, may-alias: {4,5}]
  %s6 = sld [smem:[#allocation0]]
  $region126: #{tpu_custom_call.1} parent=0
    _
  %s8 = ssub.s32 1, %s6
  %s9 = scalar_select 0, %s8, %s6
  %10 = sst [smem:[#allocation2]] %s3
  $region1: #{tpu_custom_call.1} parent=0
    #allocation3 [shape = 'u8[512]{0}', space=smem, size = 0x200, scoped, tag = 'input window, operand 0, single buffered']
    #allocation4 [shape = 's32[1]{0}', space=sflag, size = 0x4, scoped, tag = 'scoped memory for tpu_custom_call.1']
    #allocation5 [shape = 's32[1]{0}', space=sflag, size = 0x4, scoped, tag = 'scoped memory for tpu_custom_call.1']
    #allocation6 [shape = 's32[1]{0}', space=sflag, size = 0x4, scoped, tag = 'scoped memory for tpu_custom_call.1']
    #allocation7 [shape = 'u8[512]{0}', space=smem, size = 0x200, scoped, tag = 'input window, operand 1, single buffered']
    #allocation8 [shape = 's32[1]{0}', space=sflag, size = 0x4, scoped, tag = 'scoped memory for tpu_custom_call.1']
    #allocation9 [shape = 'u8[512]{0}', space=smem, size = 0x200, scoped, tag = 'input window, operand 2, single buffered']
    #allocation10 [shape = 'u8[4096]{0}', space=vmem, size = 0x1000, scoped, tag = 'input window, operand 4, single buffered']
    #allocation11 [shape = 'u8[4096]{0}', space=vmem, size = 0x1000, scoped, tag = 'output window, operand 0, single buffered']
    %11 = vsyncpa [#allocation6], 0
    %12 = vsyncpa [#allocation8], 0
    %13 = vsyncpa [#allocation4], 0
    %14 = vsyncpa [#allocation5], 0
    // Predicated region
    $region2: #{tpu_custom_call.1} parent=1 // pred_check
      _
    $region3: #{tpu_custom_call.1} parent=1 // pred_check_branch
      %16 = sbr.rel (0) target = $region5
    $region4: #{tpu_custom_call.1} parent=1 // pred_region
      %s18 = ssub.s32 16, 16
      %19 = vsyncadd [#allocation6], %s18
      %s21 = sshll.u32 %s0, 4
      %s22 = int_to_ptr.vmem [resolvable:$true] %s21
      %24 = dma.vmem_to_smem %s22, 16, [#allocation3], [#allocation6]
    $region5: #{tpu_custom_call.1} parent=1 // pred_fallthru
      _
    // Predicated region
    $region6: #{tpu_custom_call.1} parent=1 // pred_check
      _
    $region7: #{tpu_custom_call.1} parent=1 // pred_check_branch
      %26 = sbr.rel (0) target = $region9
    $region8: #{tpu_custom_call.1} parent=1 // pred_region
      %s28 = ssub.s32 16, 16
      %29 = vsyncadd [#allocation8], %s28
      %s31 = sshll.u32 %s1, 4
      %s32 = int_to_ptr.vmem [resolvable:$true] %s31
      %34 = dma.vmem_to_smem %s32, 16, [#allocation7], [#allocation8]
    $region9: #{tpu_custom_call.1} parent=1 // pred_fallthru
      _
    // Predicated region
    $region10: #{tpu_custom_call.1} parent=1 // pred_check
      _
    $region11: #{tpu_custom_call.1} parent=1 // pred_check_branch
      %36 = sbr.rel (0) target = $region13
    $region12: #{tpu_custom_call.1} parent=1 // pred_region
      %s38 = ssub.s32 16, 16
      %39 = vsyncadd [#allocation8], %s38
      %s41 = sshll.u32 %s2, 4
      %s42 = int_to_ptr.vmem [resolvable:$true] %s41
      %44 = dma.vmem_to_smem %s42, 16, [#allocation9], [#allocation8]
    $region13: #{tpu_custom_call.1} parent=1 // pred_fallthru
      _
    // Predicated region
    $region14: #{tpu_custom_call.1} parent=1 // pred_check
      _
    $region15: #{tpu_custom_call.1} parent=1 // pred_check_branch
      %46 = sbr.rel (0) target = $region17
    $region16: #{tpu_custom_call.1} parent=1 // pred_region
      _
    $region17: #{tpu_custom_call.1} parent=1 // pred_fallthru
      _
    // Predicated region
    $region18: #{tpu_custom_call.1} parent=1 // pred_check
      _
    $region19: #{tpu_custom_call.1} parent=1 // pred_check_branch
      %48 = sbr.rel (0) target = $region21
    $region20: #{tpu_custom_call.1} parent=1 // pred_region
      %s50 = ssub.s32 128, 128
      %51 = vsyncadd [#allocation4], %s50
      %s53 = sshll.u32 [#allocation10], 4
      %s54 = int_to_ptr.vmem [resolvable:$true] %s53
      %56 = dma.hbm_to_vmem [thread:$0]  %s4, 128, %s54, [#allocation4]
    $region21: #{tpu_custom_call.1} parent=1 // pred_fallthru
      _
    // Predicated region
    $region22: #{tpu_custom_call.1} parent=1 // pred_check
      _
    $region23: #{tpu_custom_call.1} parent=1 // pred_check_branch
      %58 = sbr.rel (0) target = $region25
    $region24: #{tpu_custom_call.1} parent=1 // pred_region
      %59 = dma.done [#allocation6], 16
    $region25: #{tpu_custom_call.1} parent=1 // pred_fallthru
      _
    // Predicated region
    $region26: #{tpu_custom_call.1} parent=1 // pred_check
      _
    $region27: #{tpu_custom_call.1} parent=1 // pred_check_branch
      %61 = sbr.rel (0) target = $region29
    $region28: #{tpu_custom_call.1} parent=1 // pred_region
      %62 = dma.done [#allocation8], 16
    $region29: #{tpu_custom_call.1} parent=1 // pred_fallthru
      _
    // Predicated region
    $region30: #{tpu_custom_call.1} parent=1 // pred_check
      _
    $region31: #{tpu_custom_call.1} parent=1 // pred_check_branch
      %64 = sbr.rel (0) target = $region33
    $region32: #{tpu_custom_call.1} parent=1 // pred_region
      %65 = dma.done [#allocation8], 16
    $region33: #{tpu_custom_call.1} parent=1 // pred_fallthru
      _
    // Predicated region
    $region34: #{tpu_custom_call.1} parent=1 // pred_check
      _
    $region35: #{tpu_custom_call.1} parent=1 // pred_check_branch
      %67 = sbr.rel (0) target = $region37
    $region36: #{tpu_custom_call.1} parent=1 // pred_region
      %68 = dma.done [#allocation4], 128
    $region37: #{tpu_custom_call.1} parent=1 // pred_fallthru
      _
    %69 = sfence
    %s70 = sld [smem:[#allocation2]]
    %v71 = vstv %s70
    %72 = vst [vmem:[#allocation11] sm:$0xff] %v71
    %s73 = sld [smem:[#allocation3]]
    %s74 = sld [smem:[#allocation7]]
    %s75 = sld [smem:[#allocation9]]
    %p76 = scmp.ne.s32.totalorder %s75, 0
    // Predicated region
    $region38: #{tpu_custom_call.1} parent=1 // pred_check
      %p77 = pneg %p76
    $region39: #{tpu_custom_call.1} parent=1 // pred_check_branch
      %79 = sbr.rel (%p77) target = $region41
    $region40: #{tpu_custom_call.1} parent=1 // pred_region
      %v80 = vld [vmem:[#allocation10] sm:$0xff]
      %v81 = vld [vmem:[#allocation11] sm:$0xff]
      %v82 = vstv %s73
      %v83 = vmul.f32 %v80, %v82
      %v84 = vstv %s74
      %v85 = vadd.f32 %v83, %v84
      %v86 = vmax.f32 %v85, 0.0
      %v87 = vadd.f32 %v81, %v86
      %88 = vst [vmem:[#allocation11] sm:$0xff] %v87
    $region41: #{tpu_custom_call.1} parent=1 // pred_fallthru
      _
    %s89 = sld [smem:[#allocation9]]
    %p90 = scmp.eq.s32.totalorder %s89, 0
    // Predicated region
    $region42: #{tpu_custom_call.1} parent=1 // pred_check
      %p91 = pneg %p90
    $region43: #{tpu_custom_call.1} parent=1 // pred_check_branch
      %93 = sbr.rel (%p91) target = $region45
    $region44: #{tpu_custom_call.1} parent=1 // pred_region
      %v94 = vld [vmem:[#allocation10] sm:$0xff]
      %v95 = vld [vmem:[#allocation11] sm:$0xff]
      %v96 = vstv %s73
      %v97 = vmul.f32 %v94, %v96
      %v98 = vstv %s74
      %v99 = vadd.f32 %v97, %v98
      %v100 = vmin.f32 %v99, 0.0
      %v101 = vadd.f32 %v95, %v100
      %102 = vst [vmem:[#allocation11] sm:$0xff] %v101
    $region45: #{tpu_custom_call.1} parent=1 // pred_fallthru
      _
    %s103 = sld [smem:[#allocation3 + $0x1]]
    %s104 = sld [smem:[#allocation7 + $0x1]]
    %s105 = sld [smem:[#allocation9 + $0x1]]
    %p106 = scmp.ne.s32.totalorder %s105, 0
    // Predicated region
    $region46: #{tpu_custom_call.1} parent=1 // pred_check
      %p107 = pneg %p106
    $region47: #{tpu_custom_call.1} parent=1 // pred_check_branch
      %109 = sbr.rel (%p107) target = $region49
    $region48: #{tpu_custom_call.1} parent=1 // pred_region
      %v110 = vld [vmem:[#allocation10] sm:$0xff]
      %v111 = vld [vmem:[#allocation11] sm:$0xff]
      %v112 = vstv %s103
      %v113 = vmul.f32 %v110, %v112
      %v114 = vstv %s104
      %v115 = vadd.f32 %v113, %v114
      %v116 = vmax.f32 %v115, 0.0
      %v117 = vadd.f32 %v111, %v116
      %118 = vst [vmem:[#allocation11] sm:$0xff] %v117
    $region49: #{tpu_custom_call.1} parent=1 // pred_fallthru
      _
    %s119 = sld [smem:[#allocation9 + $0x1]]
    %p120 = scmp.eq.s32.totalorder %s119, 0
    // Predicated region
    $region50: #{tpu_custom_call.1} parent=1 // pred_check
      %p121 = pneg %p120
    $region51: #{tpu_custom_call.1} parent=1 // pred_check_branch
      %123 = sbr.rel (%p121) target = $region53
    $region52: #{tpu_custom_call.1} parent=1 // pred_region
      %v124 = vld [vmem:[#allocation10] sm:$0xff]
      %v125 = vld [vmem:[#allocation11] sm:$0xff]
      %v126 = vstv %s103
      %v127 = vmul.f32 %v124, %v126
      %v128 = vstv %s104
      %v129 = vadd.f32 %v127, %v128
      %v130 = vmin.f32 %v129, 0.0
      %v131 = vadd.f32 %v125, %v130
      %132 = vst [vmem:[#allocation11] sm:$0xff] %v131
    $region53: #{tpu_custom_call.1} parent=1 // pred_fallthru
      _
    %s133 = sld [smem:[#allocation3 + $0x2]]
    %s134 = sld [smem:[#allocation7 + $0x2]]
    %s135 = sld [smem:[#allocation9 + $0x2]]
    %p136 = scmp.ne.s32.totalorder %s135, 0
    // Predicated region
    $region54: #{tpu_custom_call.1} parent=1 // pred_check
      %p137 = pneg %p136
    $region55: #{tpu_custom_call.1} parent=1 // pred_check_branch
      %139 = sbr.rel (%p137) target = $region57
    $region56: #{tpu_custom_call.1} parent=1 // pred_region
      %v140 = vld [vmem:[#allocation10] sm:$0xff]
      %v141 = vld [vmem:[#allocation11] sm:$0xff]
      %v142 = vstv %s133
      %v143 = vmul.f32 %v140, %v142
      %v144 = vstv %s134
      %v145 = vadd.f32 %v143, %v144
      %v146 = vmax.f32 %v145, 0.0
      %v147 = vadd.f32 %v141, %v146
      %148 = vst [vmem:[#allocation11] sm:$0xff] %v147
    $region57: #{tpu_custom_call.1} parent=1 // pred_fallthru
      _
    %s149 = sld [smem:[#allocation9 + $0x2]]
    %p150 = scmp.eq.s32.totalorder %s149, 0
    // Predicated region
    $region58: #{tpu_custom_call.1} parent=1 // pred_check
      %p151 = pneg %p150
    $region59: #{tpu_custom_call.1} parent=1 // pred_check_branch
      %153 = sbr.rel (%p151) target = $region61
    $region60: #{tpu_custom_call.1} parent=1 // pred_region
      %v154 = vld [vmem:[#allocation10] sm:$0xff]
      %v155 = vld [vmem:[#allocation11] sm:$0xff]
      %v156 = vstv %s133
      %v157 = vmul.f32 %v154, %v156
      %v158 = vstv %s134
      %v159 = vadd.f32 %v157, %v158
      %v160 = vmin.f32 %v159, 0.0
      %v161 = vadd.f32 %v155, %v160
      %162 = vst [vmem:[#allocation11] sm:$0xff] %v161
    $region61: #{tpu_custom_call.1} parent=1 // pred_fallthru
      _
    %s163 = sld [smem:[#allocation3 + $0x3]]
    %s164 = sld [smem:[#allocation7 + $0x3]]
    %s165 = sld [smem:[#allocation9 + $0x3]]
    %p166 = scmp.ne.s32.totalorder %s165, 0
    // Predicated region
    $region62: #{tpu_custom_call.1} parent=1 // pred_check
      %p167 = pneg %p166
    $region63: #{tpu_custom_call.1} parent=1 // pred_check_branch
      %169 = sbr.rel (%p167) target = $region65
    $region64: #{tpu_custom_call.1} parent=1 // pred_region
      %v170 = vld [vmem:[#allocation10] sm:$0xff]
      %v171 = vld [vmem:[#allocation11] sm:$0xff]
      %v172 = vstv %s163
      %v173 = vmul.f32 %v170, %v172
      %v174 = vstv %s164
      %v175 = vadd.f32 %v173, %v174
      %v176 = vmax.f32 %v175, 0.0
      %v177 = vadd.f32 %v171, %v176
      %178 = vst [vmem:[#allocation11] sm:$0xff] %v177
    $region65: #{tpu_custom_call.1} parent=1 // pred_fallthru
      _
    %s179 = sld [smem:[#allocation9 + $0x3]]
    %p180 = scmp.eq.s32.totalorder %s179, 0
    // Predicated region
    $region66: #{tpu_custom_call.1} parent=1 // pred_check
      %p181 = pneg %p180
    $region67: #{tpu_custom_call.1} parent=1 // pred_check_branch
      %183 = sbr.rel (%p181) target = $region69
    $region68: #{tpu_custom_call.1} parent=1 // pred_region
      %v184 = vld [vmem:[#allocation10] sm:$0xff]
      %v185 = vld [vmem:[#allocation11] sm:$0xff]
      %v186 = vstv %s163
      %v187 = vmul.f32 %v184, %v186
      %v188 = vstv %s164
      %v189 = vadd.f32 %v187, %v188
      %v190 = vmin.f32 %v189, 0.0
      %v191 = vadd.f32 %v185, %v190
      %192 = vst [vmem:[#allocation11] sm:$0xff] %v191
    $region69: #{tpu_custom_call.1} parent=1 // pred_fallthru
      _
    %s193 = sld [smem:[#allocation3 + $0x4]]
    %s194 = sld [smem:[#allocation7 + $0x4]]
    %s195 = sld [smem:[#allocation9 + $0x4]]
    %p196 = scmp.ne.s32.totalorder %s195, 0
    // Predicated region
    $region70: #{tpu_custom_call.1} parent=1 // pred_check
      %p197 = pneg %p196
    $region71: #{tpu_custom_call.1} parent=1 // pred_check_branch
      %199 = sbr.rel (%p197) target = $region73
    $region72: #{tpu_custom_call.1} parent=1 // pred_region
      %v200 = vld [vmem:[#allocation10] sm:$0xff]
      %v201 = vld [vmem:[#allocation11] sm:$0xff]
      %v202 = vstv %s193
      %v203 = vmul.f32 %v200, %v202
      %v204 = vstv %s194
      %v205 = vadd.f32 %v203, %v204
      %v206 = vmax.f32 %v205, 0.0
      %v207 = vadd.f32 %v201, %v206
      %208 = vst [vmem:[#allocation11] sm:$0xff] %v207
    $region73: #{tpu_custom_call.1} parent=1 // pred_fallthru
      _
    %s209 = sld [smem:[#allocation9 + $0x4]]
    %p210 = scmp.eq.s32.totalorder %s209, 0
    // Predicated region
    $region74: #{tpu_custom_call.1} parent=1 // pred_check
      %p211 = pneg %p210
    $region75: #{tpu_custom_call.1} parent=1 // pred_check_branch
      %213 = sbr.rel (%p211) target = $region77
    $region76: #{tpu_custom_call.1} parent=1 // pred_region
      %v214 = vld [vmem:[#allocation10] sm:$0xff]
      %v215 = vld [vmem:[#allocation11] sm:$0xff]
      %v216 = vstv %s193
      %v217 = vmul.f32 %v214, %v216
      %v218 = vstv %s194
      %v219 = vadd.f32 %v217, %v218
      %v220 = vmin.f32 %v219, 0.0
      %v221 = vadd.f32 %v215, %v220
      %222 = vst [vmem:[#allocation11] sm:$0xff] %v221
    $region77: #{tpu_custom_call.1} parent=1 // pred_fallthru
      _
    %s223 = sld [smem:[#allocation3 + $0x5]]
    %s224 = sld [smem:[#allocation7 + $0x5]]
    %s225 = sld [smem:[#allocation9 + $0x5]]
    %p226 = scmp.ne.s32.totalorder %s225, 0
    // Predicated region
    $region78: #{tpu_custom_call.1} parent=1 // pred_check
      %p227 = pneg %p226
    $region79: #{tpu_custom_call.1} parent=1 // pred_check_branch
      %229 = sbr.rel (%p227) target = $region81
    $region80: #{tpu_custom_call.1} parent=1 // pred_region
      %v230 = vld [vmem:[#allocation10] sm:$0xff]
      %v231 = vld [vmem:[#allocation11] sm:$0xff]
      %v232 = vstv %s223
      %v233 = vmul.f32 %v230, %v232
      %v234 = vstv %s224
      %v235 = vadd.f32 %v233, %v234
      %v236 = vmax.f32 %v235, 0.0
      %v237 = vadd.f32 %v231, %v236
      %238 = vst [vmem:[#allocation11] sm:$0xff] %v237
    $region81: #{tpu_custom_call.1} parent=1 // pred_fallthru
      _
    %s239 = sld [smem:[#allocation9 + $0x5]]
    %p240 = scmp.eq.s32.totalorder %s239, 0
    // Predicated region
    $region82: #{tpu_custom_call.1} parent=1 // pred_check
      %p241 = pneg %p240
    $region83: #{tpu_custom_call.1} parent=1 // pred_check_branch
      %243 = sbr.rel (%p241) target = $region85
    $region84: #{tpu_custom_call.1} parent=1 // pred_region
      %v244 = vld [vmem:[#allocation10] sm:$0xff]
      %v245 = vld [vmem:[#allocation11] sm:$0xff]
      %v246 = vstv %s223
      %v247 = vmul.f32 %v244, %v246
      %v248 = vstv %s224
      %v249 = vadd.f32 %v247, %v248
      %v250 = vmin.f32 %v249, 0.0
      %v251 = vadd.f32 %v245, %v250
      %252 = vst [vmem:[#allocation11] sm:$0xff] %v251
    $region85: #{tpu_custom_call.1} parent=1 // pred_fallthru
      _
    %s253 = sld [smem:[#allocation3 + $0x6]]
    %s254 = sld [smem:[#allocation7 + $0x6]]
    %s255 = sld [smem:[#allocation9 + $0x6]]
    %p256 = scmp.ne.s32.totalorder %s255, 0
    // Predicated region
    $region86: #{tpu_custom_call.1} parent=1 // pred_check
      %p257 = pneg %p256
    $region87: #{tpu_custom_call.1} parent=1 // pred_check_branch
      %259 = sbr.rel (%p257) target = $region89
    $region88: #{tpu_custom_call.1} parent=1 // pred_region
      %v260 = vld [vmem:[#allocation10] sm:$0xff]
      %v261 = vld [vmem:[#allocation11] sm:$0xff]
      %v262 = vstv %s253
      %v263 = vmul.f32 %v260, %v262
      %v264 = vstv %s254
      %v265 = vadd.f32 %v263, %v264
      %v266 = vmax.f32 %v265, 0.0
      %v267 = vadd.f32 %v261, %v266
      %268 = vst [vmem:[#allocation11] sm:$0xff] %v267
    $region89: #{tpu_custom_call.1} parent=1 // pred_fallthru
      _
    %s269 = sld [smem:[#allocation9 + $0x6]]
    %p270 = scmp.eq.s32.totalorder %s269, 0
    // Predicated region
    $region90: #{tpu_custom_call.1} parent=1 // pred_check
      %p271 = pneg %p270
    $region91: #{tpu_custom_call.1} parent=1 // pred_check_branch
      %273 = sbr.rel (%p271) target = $region93
    $region92: #{tpu_custom_call.1} parent=1 // pred_region
      %v274 = vld [vmem:[#allocation10] sm:$0xff]
      %v275 = vld [vmem:[#allocation11] sm:$0xff]
      %v276 = vstv %s253
      %v277 = vmul.f32 %v274, %v276
      %v278 = vstv %s254
      %v279 = vadd.f32 %v277, %v278
      %v280 = vmin.f32 %v279, 0.0
      %v281 = vadd.f32 %v275, %v280
      %282 = vst [vmem:[#allocation11] sm:$0xff] %v281
    $region93: #{tpu_custom_call.1} parent=1 // pred_fallthru
      _
    %s283 = sld [smem:[#allocation3 + $0x7]]
    %s284 = sld [smem:[#allocation7 + $0x7]]
    %s285 = sld [smem:[#allocation9 + $0x7]]
    %p286 = scmp.ne.s32.totalorder %s285, 0
    // Predicated region
    $region94: #{tpu_custom_call.1} parent=1 // pred_check
      %p287 = pneg %p286
    $region95: #{tpu_custom_call.1} parent=1 // pred_check_branch
      %289 = sbr.rel (%p287) target = $region97
    $region96: #{tpu_custom_call.1} parent=1 // pred_region
      %v290 = vld [vmem:[#allocation10] sm:$0xff]
      %v291 = vld [vmem:[#allocation11] sm:$0xff]
      %v292 = vstv %s283
      %v293 = vmul.f32 %v290, %v292
      %v294 = vstv %s284
      %v295 = vadd.f32 %v293, %v294
      %v296 = vmax.f32 %v295, 0.0
      %v297 = vadd.f32 %v291, %v296
      %298 = vst [vmem:[#allocation11] sm:$0xff] %v297
    $region97: #{tpu_custom_call.1} parent=1 // pred_fallthru
      _
    %s299 = sld [smem:[#allocation9 + $0x7]]
    %p300 = scmp.eq.s32.totalorder %s299, 0
    // Predicated region
    $region98: #{tpu_custom_call.1} parent=1 // pred_check
      %p301 = pneg %p300
    $region99: #{tpu_custom_call.1} parent=1 // pred_check_branch
      %303 = sbr.rel (%p301) target = $region101
    $region100: #{tpu_custom_call.1} parent=1 // pred_region
      %v304 = vld [vmem:[#allocation10] sm:$0xff]
      %v305 = vld [vmem:[#allocation11] sm:$0xff]
      %v306 = vstv %s283
      %v307 = vmul.f32 %v304, %v306
      %v308 = vstv %s284
      %v309 = vadd.f32 %v307, %v308
      %v310 = vmin.f32 %v309, 0.0
      %v311 = vadd.f32 %v305, %v310
      %312 = vst [vmem:[#allocation11] sm:$0xff] %v311
    $region101: #{tpu_custom_call.1} parent=1 // pred_fallthru
      _
    %s313 = sld [smem:[#allocation3 + $0x8]]
    %s314 = sld [smem:[#allocation7 + $0x8]]
    %s315 = sld [smem:[#allocation9 + $0x8]]
    %p316 = scmp.ne.s32.totalorder %s315, 0
    // Predicated region
    $region102: #{tpu_custom_call.1} parent=1 // pred_check
      %p317 = pneg %p316
    $region103: #{tpu_custom_call.1} parent=1 // pred_check_branch
      %319 = sbr.rel (%p317) target = $region105
    $region104: #{tpu_custom_call.1} parent=1 // pred_region
      %v320 = vld [vmem:[#allocation10] sm:$0xff]
      %v321 = vld [vmem:[#allocation11] sm:$0xff]
      %v322 = vstv %s313
      %v323 = vmul.f32 %v320, %v322
      %v324 = vstv %s314
      %v325 = vadd.f32 %v323, %v324
      %v326 = vmax.f32 %v325, 0.0
      %v327 = vadd.f32 %v321, %v326
      %328 = vst [vmem:[#allocation11] sm:$0xff] %v327
    $region105: #{tpu_custom_call.1} parent=1 // pred_fallthru
      _
    %s329 = sld [smem:[#allocation9 + $0x8]]
    %p330 = scmp.eq.s32.totalorder %s329, 0
    // Predicated region
    $region106: #{tpu_custom_call.1} parent=1 // pred_check
      %p331 = pneg %p330
    $region107: #{tpu_custom_call.1} parent=1 // pred_check_branch
      %333 = sbr.rel (%p331) target = $region109
    $region108: #{tpu_custom_call.1} parent=1 // pred_region
      %v334 = vld [vmem:[#allocation10] sm:$0xff]
      %v335 = vld [vmem:[#allocation11] sm:$0xff]
      %v336 = vstv %s313
      %v337 = vmul.f32 %v334, %v336
      %v338 = vstv %s314
      %v339 = vadd.f32 %v337, %v338
      %v340 = vmin.f32 %v339, 0.0
      %v341 = vadd.f32 %v335, %v340
      %342 = vst [vmem:[#allocation11] sm:$0xff] %v341
    $region109: #{tpu_custom_call.1} parent=1 // pred_fallthru
      _
    %s343 = sld [smem:[#allocation3 + $0x9]]
    %s344 = sld [smem:[#allocation7 + $0x9]]
    %s345 = sld [smem:[#allocation9 + $0x9]]
    %p346 = scmp.ne.s32.totalorder %s345, 0
    // Predicated region
    $region110: #{tpu_custom_call.1} parent=1 // pred_check
      %p347 = pneg %p346
    $region111: #{tpu_custom_call.1} parent=1 // pred_check_branch
      %349 = sbr.rel (%p347) target = $region113
    $region112: #{tpu_custom_call.1} parent=1 // pred_region
      %v350 = vld [vmem:[#allocation10] sm:$0xff]
      %v351 = vld [vmem:[#allocation11] sm:$0xff]
      %v352 = vstv %s343
      %v353 = vmul.f32 %v350, %v352
      %v354 = vstv %s344
      %v355 = vadd.f32 %v353, %v354
      %v356 = vmax.f32 %v355, 0.0
      %v357 = vadd.f32 %v351, %v356
      %358 = vst [vmem:[#allocation11] sm:$0xff] %v357
    $region113: #{tpu_custom_call.1} parent=1 // pred_fallthru
      _
    %s359 = sld [smem:[#allocation9 + $0x9]]
    %p360 = scmp.eq.s32.totalorder %s359, 0
    // Predicated region
    $region114: #{tpu_custom_call.1} parent=1 // pred_check
      %p361 = pneg %p360
    $region115: #{tpu_custom_call.1} parent=1 // pred_check_branch
      %363 = sbr.rel (%p361) target = $region117
    $region116: #{tpu_custom_call.1} parent=1 // pred_region
      %v364 = vld [vmem:[#allocation10] sm:$0xff]
      %v365 = vld [vmem:[#allocation11] sm:$0xff]
      %v366 = vstv %s343
      %v367 = vmul.f32 %v364, %v366
      %v368 = vstv %s344
      %v369 = vadd.f32 %v367, %v368
      %v370 = vmin.f32 %v369, 0.0
      %v371 = vadd.f32 %v365, %v370
      %372 = vst [vmem:[#allocation11] sm:$0xff] %v371
    $region117: #{tpu_custom_call.1} parent=1 // pred_fallthru
      _
    // Predicated region
    $region118: #{tpu_custom_call.1} parent=1 // pred_check
      _
    $region119: #{tpu_custom_call.1} parent=1 // pred_check_branch
      %374 = sbr.rel (0) target = $region121
    $region120: #{tpu_custom_call.1} parent=1 // pred_region
      %s376 = ssub.s32 128, 128
      %377 = vsyncadd [#allocation5], %s376
      %s379 = sshll.u32 [#allocation11], 4
      %s380 = int_to_ptr.vmem [resolvable:$true] %s379
      %382 = dma.vmem_to_hbm [thread:$0]  %s380, 128, %s5, [#allocation5]
    $region121: #{tpu_custom_call.1} parent=1 // pred_fallthru
      _
    // Predicated region
    $region122: #{tpu_custom_call.1} parent=1 // pred_check
      _
    $region123: #{tpu_custom_call.1} parent=1 // pred_check_branch
      %384 = sbr.rel (0) target = $region125
    $region124: #{tpu_custom_call.1} parent=1 // pred_region
      %385 = dma.done [#allocation5], 128
    $region125: #{tpu_custom_call.1} parent=1 // pred_fallthru
      _
    %386 = vsyncpa [#allocation4], 1
    %387 = vsyncpa [#allocation5], 1
    %388 = vsyncpa [#allocation6], 1
    %389 = vsyncpa [#allocation8], 1

</llo_original>
